<compile_context>
chip_gen: v5e
topology: v5e:2x2
jax: 0.10.0
libtpu: 0.0.40
codegen_flags: <defaults>
</compile_context>

<pallas_src>
import jax
import jax.numpy as jnp
from jax import lax
from jax.experimental import pallas as pl
from jax.experimental.pallas import tpu as pltpu

EPS = 1e-5


# ---------------------------------------------------------------------------
# Kernels
# ---------------------------------------------------------------------------
def _layernorm_affine_kernel(x_ref, w_ref, b_ref, o_ref):
    # x_ref: (block_rows, H); w_ref / b_ref: (1, H) float32; o_ref: (block_rows, H)
    x = x_ref[...].astype(jnp.float32)
    mean = jnp.mean(x, axis=-1, keepdims=True)
    xc = x - mean
    var = jnp.mean(xc * xc, axis=-1, keepdims=True)
    inv = lax.rsqrt(var + EPS)
    o_ref[...] = ((xc * inv) * w_ref[...] + b_ref[...]).astype(o_ref.dtype)


def _layernorm_scale_kernel(x_ref, w_ref, o_ref):
    # bias=None variant: no zeros-bias buffer, no per-element add.
    x = x_ref[...].astype(jnp.float32)
    mean = jnp.mean(x, axis=-1, keepdims=True)
    xc = x - mean
    var = jnp.mean(xc * xc, axis=-1, keepdims=True)
    inv = lax.rsqrt(var + EPS)
    o_ref[...] = ((xc * inv) * w_ref[...]).astype(o_ref.dtype)


# ---------------------------------------------------------------------------
# Generation-aware resource sizing
# ---------------------------------------------------------------------------
def _tpu_resources():
    """Returns (per-core VMEM capacity bytes, number of TensorCores sharing the grid).

    Conservative defaults if the query is unavailable (e.g. interpret mode)."""
    vmem_cap = 128 << 20  # v5e / v6e default
    num_cores = 1
    try:
        info = pltpu.get_tpu_info()
        cap = getattr(info, "vmem_capacity_bytes", None)
        if cap:
            vmem_cap = int(cap)
        nc = getattr(info, "num_cores", None) or getattr(info, "cores_per_chip", None)
        if nc:
            num_cores = int(nc)
        elif vmem_cap <= (64 << 20):
            # v7x: 64 MiB VMEM per TC, 2 TCs per chip share the ("parallel",) grid.
            num_cores = 2
    except Exception:
        pass
    return vmem_cap, num_cores


def _row_align(itemsize):
    # Packed-sublane multiple: 8 rows for 32-bit, 16 for bf16/fp16, 32 for int8/fp8.
    return max(8, 32 // int(itemsize))


def _auto_block_rows(R, H, itemsize, vmem_budget_bytes, num_cores, row_align):
    """Largest row-tile fitting the VMEM budget (double-buffered in/out tiles +
    ~3 f32 temporaries per element), capped at 1024 rows, aligned to the dtype's
    packed-sublane multiple, and split up enough to keep every TensorCore fed."""
    # ~2x input buf + ~2x output buf (itemsize each) + ~3 f32 temporaries per element.
    per_row = H * (4 * itemsize + 12)
    max_rows = max(row_align, vmem_budget_bytes // per_row)
    block_rows = min(1024, max_rows)
    block_rows = max(row_align, (block_rows // row_align) * row_align)
    # Never larger than needed to cover all rows (rounded up to the sublane multiple).
    rows_needed = ((R + row_align - 1) // row_align) * row_align
    block_rows = min(block_rows, rows_needed)

    # Keep enough pipeline steps alive (without going below 256 rows):
    #   1-TC chips (v5e/v6e): ~4 steps hide the DMA; don't over-split large tiles.
    #   2-TC chips (v7x): >= 8 steps (>= 4 per core).
    min_steps = 8 if num_cores > 1 else 4
    while block_rows > 256 and -(-R // block_rows) < min_steps:
        block_rows = max(256, ((block_rows // 2) // row_align) * row_align)

    # On multi-core chips never leave a core idle: require >= 2 blocks per core,
    # even if that means tiles smaller than 256 rows.
    if num_cores > 1:
        while block_rows > row_align and -(-R // block_rows) < 2 * num_cores:
            block_rows = max(row_align, ((block_rows // 2) // row_align) * row_align)
    return int(block_rows)


# ---------------------------------------------------------------------------
# Wrapper
# ---------------------------------------------------------------------------
def layer_norm_pallas(x, weight, bias=None, block_rows=None):
    """LayerNorm over the last axis of x (any leading shape), matching
    F.layer_norm(x, (H,), weight, bias, eps=1e-5)."""
    orig_shape = x.shape
    H = orig_shape[-1]
    x2 = x.reshape(-1, H)
    R = x2.shape[0]
    itemsize = jnp.dtype(x2.dtype).itemsize
    row_align = _row_align(itemsize)

    vmem_cap, num_cores = _tpu_resources()
    if vmem_cap >= (128 << 20):
        # v5e / v6e: 128 MiB physical — use most of it for the row tiles.
        vmem_budget = 96 << 20
        limit_cap = 100 << 20
    else:
        # v7x (64 MiB per TC): leave headroom for compiler scratch / semaphores.
        vmem_budget = max(16 << 20, vmem_cap - (16 << 20))
        limit_cap = max(24 << 20, vmem_cap - (8 << 20))

    if block_rows is None:
        block_rows = _auto_block_rows(R, H, itemsize, vmem_budget, num_cores, row_align)

    # Hoist the f32 cast of the affine params out of the kernel body; constant
    # index_map keeps them VMEM-resident across the whole grid.
    w2 = weight.astype(jnp.float32).reshape(1, H)
    has_bias = bias is not None
    if has_bias:
        b2 = bias.astype(jnp.float32).reshape(1, H)

    grid = (pl.cdiv(R, block_rows),)

    # Right-size the scoped VMEM limit: double-buffered I/O tiles + f32 temporaries
    # + resident params + 8 MiB slack, never exceeding the generation cap.
    n_params = 2 if has_bias else 1
    footprint = block_rows * H * (4 * itemsize + 12) + n_params * H * 4 + (1 << 20)
    vmem_limit = int(min(limit_cap, max(footprint + (8 << 20), 32 << 20)))

    cost = pl.CostEstimate(
        flops=int(5 * R * H),
        transcendentals=int(R),
        bytes_accessed=int(2 * R * H * itemsize + n_params * H * 4),
    )

    row_spec = pl.BlockSpec((block_rows, H), lambda i: (i, 0))
    param_spec = pl.BlockSpec((1, H), lambda i: (0, 0))

    if has_bias:
        kernel = _layernorm_affine_kernel
        in_specs = [row_spec, param_spec, param_spec]
        args = (x2, w2, b2)
    else:
        kernel = _layernorm_scale_kernel
        in_specs = [row_spec, param_spec]
        args = (x2, w2)

    out = pl.pallas_call(
        kernel,
        out_shape=jax.ShapeDtypeStruct((R, H), x.dtype),
        grid_spec=pltpu.PrefetchScalarGridSpec(
            num_scalar_prefetch=0,
            grid=grid,
            in_specs=in_specs,
            out_specs=pl.BlockSpec((block_rows, H), lambda i: (i, 0)),
        ),
        compiler_params=pltpu.CompilerParams(
            dimension_semantics=("parallel",),
            vmem_limit_bytes=vmem_limit,
        ),
        cost_estimate=cost,
    )(*args)

    return out.reshape(orig_shape)


# ---------------------------------------------------------------------------
# Reference + checks
# ---------------------------------------------------------------------------
def _layernorm_ref(x, w, b=None):
    xf = x.astype(jnp.float32)
    mean = jnp.mean(xf, axis=-1, keepdims=True)
    var = jnp.mean((xf - mean) ** 2, axis=-1, keepdims=True)
    y = (xf - mean) / jnp.sqrt(var + EPS) * w.astype(jnp.float32)
    if b is not None:
        y = y + b.astype(jnp.float32)
    return y.astype(x.dtype)


if __name__ == "__main__":
    # Main check: lane-dense hidden size (multiple of 128), the intended fast path.
    key = jax.random.PRNGKey(0)
    batch, seq, hidden = 2, 8, 128
    x = jax.random.normal(key, (batch, seq, hidden), dtype=jnp.float32)

    # Parameter init matching nn.Parameter(torch.ones(ndim)) / torch.zeros(ndim).
    weight = jnp.ones((hidden,), jnp.float32)
    bias = jnp.zeros((hidden,), jnp.float32)  # bias=True case

    y = jax.block_until_ready(layer_norm_pallas(x, weight, bias))
    ref = _layernorm_ref(x, weight, bias)
    assert jnp.allclose(y, ref, atol=1e-5, rtol=1e-5), "mismatch vs reference (H=128)"

    # Secondary check: small H (<128) and ragged row count (exercises the masked
    # boundary block from the cdiv grid + non-trivial affine params).
    x_s = jax.random.normal(jax.random.PRNGKey(1), (3, 7, 32), dtype=jnp.float32)
    w_s = 1.0 + 0.1 * jax.random.normal(jax.random.PRNGKey(2), (32,), jnp.float32)
    b_s = 0.1 * jax.random.normal(jax.random.PRNGKey(3), (32,), jnp.float32)
    y_s = jax.block_until_ready(layer_norm_pallas(x_s, w_s, b_s))
    ref_s = _layernorm_ref(x_s, w_s, b_s)
    assert jnp.allclose(y_s, ref_s, atol=1e-5, rtol=1e-5), "mismatch vs reference (H=32)"

    # bias=None path (module's bias=False case) — uses the bias-free kernel variant.
    y_nb = jax.block_until_ready(layer_norm_pallas(x, weight, None))
    ref_nb = _layernorm_ref(x, weight, None)
    assert jnp.allclose(y_nb, ref_nb, atol=1e-5, rtol=1e-5), "mismatch vs reference (no bias)"

    # bf16 path (exercises 16-row sublane alignment and in-kernel f32 promotion).
    x_bf = jax.random.normal(jax.random.PRNGKey(4), (4, 8, 128), dtype=jnp.bfloat16)
    w_bf = (1.0 + 0.1 * jax.random.normal(jax.random.PRNGKey(5), (128,), jnp.float32)).astype(jnp.bfloat16)
    b_bf = (0.1 * jax.random.normal(jax.random.PRNGKey(6), (128,), jnp.float32)).astype(jnp.bfloat16)
    y_bf = jax.block_until_ready(layer_norm_pallas(x_bf, w_bf, b_bf))
    ref_bf = _layernorm_ref(x_bf, w_bf, b_bf)
    assert jnp.allclose(
        y_bf.astype(jnp.float32), ref_bf.astype(jnp.float32), atol=2e-2, rtol=2e-2
    ), "mismatch vs reference (bf16)"

    print("KERNEL_OK")
</pallas_src>

<mosaic_0001>
module attributes {stable_mosaic.version = 11 : i64} {
  func.func @_layernorm_affine_kernel(%arg0: i32, %arg1: memref<16x128xf32, #tpu.memory_space<vmem>>, %arg2: memref<1x128xf32, #tpu.memory_space<vmem>>, %arg3: memref<1x128xf32, #tpu.memory_space<vmem>>, %arg4: memref<16x128xf32, #tpu.memory_space<vmem>>) attributes {dimension_semantics = [#tpu.dimension_semantics<parallel>], iteration_bounds = array<i64: 1>, scalar_prefetch = 0 : i64, scratch_operands = 0 : i64, tpu.core_type = #tpu.core_type<tc>, window_params = [{transform_indices = @transform_0, window_bounds = array<i64: 16, 128>}, {pipeline_mode = #tpu.pipeline_mode<synchronous>, transform_indices = @transform_1, window_bounds = array<i64: 1, 128>}, {pipeline_mode = #tpu.pipeline_mode<synchronous>, transform_indices = @transform_2, window_bounds = array<i64: 1, 128>}, {transform_indices = @transform_3, window_bounds = array<i64: 16, 128>}]} {
    %c0 = arith.constant 0 : index
    %c0_0 = arith.constant 0 : index
    %0 = vector.load %arg1[%c0, %c0_0] : memref<16x128xf32, #tpu.memory_space<vmem>>, vector<16x128xf32>
    %cst = arith.constant dense<0.000000e+00> : vector<16xf32>
    %1 = vector.multi_reduction <add>, %0, %cst [1] : vector<16x128xf32> to vector<16xf32>
    %2 = vector.shape_cast %1 : vector<16xf32> to vector<16x1xf32>
    %cst_1 = arith.constant 1.280000e+02 : f32
    %3 = vector.broadcast %cst_1 : f32 to vector<16x1xf32>
    %4 = arith.divf %2, %3 : vector<16x1xf32>
    %5 = vector.broadcast %4 : vector<16x1xf32> to vector<16x128xf32>
    %6 = arith.subf %0, %5 : vector<16x128xf32>
    %7 = arith.mulf %6, %6 : vector<16x128xf32>
    %cst_2 = arith.constant dense<0.000000e+00> : vector<16xf32>
    %8 = vector.multi_reduction <add>, %7, %cst_2 [1] : vector<16x128xf32> to vector<16xf32>
    %9 = vector.shape_cast %8 : vector<16xf32> to vector<16x1xf32>
    %cst_3 = arith.constant 1.280000e+02 : f32
    %10 = vector.broadcast %cst_3 : f32 to vector<16x1xf32>
    %11 = arith.divf %9, %10 : vector<16x1xf32>
    %cst_4 = arith.constant 9.99999974E-6 : f32
    %12 = vector.broadcast %cst_4 : f32 to vector<16x1xf32>
    %13 = arith.addf %11, %12 : vector<16x1xf32>
    %14 = math.rsqrt %13 : vector<16x1xf32>
    %15 = vector.broadcast %14 : vector<16x1xf32> to vector<16x128xf32>
    %16 = arith.mulf %6, %15 : vector<16x128xf32>
    %c0_5 = arith.constant 0 : index
    %c0_6 = arith.constant 0 : index
    %17 = vector.load %arg2[%c0_5, %c0_6] : memref<1x128xf32, #tpu.memory_space<vmem>>, vector<1x128xf32>
    %18 = vector.broadcast %17 : vector<1x128xf32> to vector<16x128xf32>
    %19 = arith.mulf %16, %18 : vector<16x128xf32>
    %c0_7 = arith.constant 0 : index
    %c0_8 = arith.constant 0 : index
    %20 = vector.load %arg3[%c0_7, %c0_8] : memref<1x128xf32, #tpu.memory_space<vmem>>, vector<1x128xf32>
    %21 = vector.broadcast %20 : vector<1x128xf32> to vector<16x128xf32>
    %22 = arith.addf %19, %21 : vector<16x128xf32>
    %c0_9 = arith.constant 0 : index
    %c0_10 = arith.constant 0 : index
    %23 = vector.load %arg4[%c0_9, %c0_10] : memref<16x128xf32, #tpu.memory_space<vmem>>, vector<16x128xf32>
    tpu.vector_store %arg4[%c0_9, %c0_10], %22 {strides = array<i32>} : memref<16x128xf32, #tpu.memory_space<vmem>>, vector<16x128xf32>,
    return
  }
  func.func @transform_0(%arg0: i32) -> (i32, i32) {
    %c0_i32 = arith.constant 0 : i32
    %c0_i32_0 = arith.constant 0 : i32
    return %arg0, %c0_i32 : i32, i32
  }
  func.func @transform_1(%arg0: i32) -> (i32, i32) {
    %c0_i32 = arith.constant 0 : i32
    %c0_i32_0 = arith.constant 0 : i32
    %c0_i32_1 = arith.constant 0 : i32
    return %c0_i32, %c0_i32_0 : i32, i32
  }
  func.func @transform_2(%arg0: i32) -> (i32, i32) {
    %c0_i32 = arith.constant 0 : i32
    %c0_i32_0 = arith.constant 0 : i32
    %c0_i32_1 = arith.constant 0 : i32
    return %c0_i32, %c0_i32_0 : i32, i32
  }
  func.func @transform_3(%arg0: i32) -> (i32, i32) {
    %c0_i32 = arith.constant 0 : i32
    %c0_i32_0 = arith.constant 0 : i32
    return %arg0, %c0_i32 : i32, i32
  }
}

</mosaic_0001>

<llo_original>
// kernel: tpu_custom_call.1
$region0: #{tpu_custom_call.1}
  #allocation0 [shape = 'u32[]', space=smem, size = 0x4, offset = 0x4, fixed_abs, tag = 'smem constant byte address 0x4 - core index']
  #allocation1 [shape = 'u32[72,128]{1,0:T(1,128)}', space=vmem, size = 0x9000, scoped, tag = 'internal scratch']
  %s0 = inlined_call_operand.hbm [shape: f32[16,128], index: 0, kind: input, shape index: {}]
  %s1 = inlined_call_operand.hbm [shape: f32[1,128], index: 1, kind: input, shape index: {}]
  %s2 = inlined_call_operand.vmem [shape: f32[1,128], index: 2, kind: input, shape index: {}]
  %s3 = inlined_call_operand.hbm [shape: f32[16,128], index: 3, kind: output, shape index: {}]
  %s4 = sld [smem:[#allocation0]]
  $region30: #{tpu_custom_call.1} parent=0
    _
  %s6 = ssub.s32 1, %s4
  %s7 = scalar_select 0, %s6, %s4
  $region1: #{tpu_custom_call.1} parent=0
    #allocation2 [shape = 'u8[8192]{0}', space=vmem, size = 0x2000, scoped, tag = 'input window, operand 0, single buffered']
    #allocation3 [shape = 's32[1]{0}', space=sflag, size = 0x4, scoped, tag = 'scoped memory for tpu_custom_call.1']
    #allocation4 [shape = 's32[1]{0}', space=sflag, size = 0x4, scoped, tag = 'scoped memory for tpu_custom_call.1']
    #allocation5 [shape = 'u8[512]{0}', space=vmem, size = 0x400, scoped, tag = 'input window, operand 1, single buffered']
    #allocation6 [shape = 's32[1]{0}', space=sflag, size = 0x4, scoped, tag = 'scoped memory for tpu_custom_call.1']
    #allocation7 [shape = 'u8[8192]{0}', space=vmem, size = 0x2000, scoped, tag = 'output window, operand 0, single buffered']
    %8 = vsyncpa [#allocation3], 0
    %9 = vsyncpa [#allocation6], 0
    %10 = vsyncpa [#allocation4], 0
    // Predicated region
    $region2: #{tpu_custom_call.1} parent=1 // pred_check
      _
    $region3: #{tpu_custom_call.1} parent=1 // pred_check_branch
      %12 = sbr.rel (0) target = $region5
    $region4: #{tpu_custom_call.1} parent=1 // pred_region
      %14 = vsyncadd [#allocation3], 0
      %s15 = sshll.u32 %s0, 4
      %s16 = int_to_ptr.hbm [resolvable:$true] %s15
      %s17 = sshll.u32 [#allocation2], 4
      %s18 = int_to_ptr.vmem [resolvable:$true] %s17
      %23 = dma.hbm_to_vmem [thread:$0]  %s16, 256, %s18, [#allocation3], 128, 128, 8
    $region5: #{tpu_custom_call.1} parent=1 // pred_fallthru
      _
    // Predicated region
    $region6: #{tpu_custom_call.1} parent=1 // pred_check
      _
    $region7: #{tpu_custom_call.1} parent=1 // pred_check_branch
      %25 = sbr.rel (0) target = $region9
    $region8: #{tpu_custom_call.1} parent=1 // pred_region
      %27 = vsyncadd [#allocation6], 0
      %s29 = sshll.u32 %s1, 4
      %s30 = int_to_ptr.hbm [resolvable:$true] %s29
      %s31 = sshll.u32 [#allocation5], 4
      %s32 = int_to_ptr.vmem [resolvable:$true] %s31
      %34 = dma.hbm_to_vmem [thread:$0]  %s30, 16, %s32, [#allocation6]
    $region9: #{tpu_custom_call.1} parent=1 // pred_fallthru
      _
    // Predicated region
    $region10: #{tpu_custom_call.1} parent=1 // pred_check
      _
    $region11: #{tpu_custom_call.1} parent=1 // pred_check_branch
      %36 = sbr.rel (0) target = $region13
    $region12: #{tpu_custom_call.1} parent=1 // pred_region
      _
    $region13: #{tpu_custom_call.1} parent=1 // pred_fallthru
      _
    // Predicated region
    $region14: #{tpu_custom_call.1} parent=1 // pred_check
      _
    $region15: #{tpu_custom_call.1} parent=1 // pred_check_branch
      %38 = sbr.rel (0) target = $region17
    $region16: #{tpu_custom_call.1} parent=1 // pred_region
      %40 = dma.done [#allocation3], 256
    $region17: #{tpu_custom_call.1} parent=1 // pred_fallthru
      _
    // Predicated region
    $region18: #{tpu_custom_call.1} parent=1 // pred_check
      _
    $region19: #{tpu_custom_call.1} parent=1 // pred_check_branch
      %42 = sbr.rel (0) target = $region21
    $region20: #{tpu_custom_call.1} parent=1 // pred_region
      %44 = dma.done [#allocation6], 16
    $region21: #{tpu_custom_call.1} parent=1 // pred_fallthru
      _
    %v45 = vld [vmem:[#allocation2] sm:$0xff]
    %v46 = vld [vmem:[#allocation2 + $0x8] sm:$0xff]
    %47 = vadd.xlane.f32.xlu0 %v45
    %v48 = vpop.xlane.xlu0 %47
    %49 = vadd.xlane.f32.xlu0 %v46
    %v50 = vpop.xlane.xlu0 %49
    %v51 = vrcp.pop 128.0
    %v52 = vmul.f32 128.0, %v51
    %v53 = vsub.f32 1.0, %v52
    %v54 = vmul.f32 %v51, %v53
    %v55 = vadd.f32 %v51, %v54
    %vm56 = vweird.f32 %v51
    %v57 = vsel %vm56, %v51, %v55
    %v58 = vmul.f32 %v48, %v57
    %v59 = vmul.f32 %v50, %v57
    %v60 = vsub.f32 %v45, %v58
    %v61 = vsub.f32 %v46, %v59
    %v62 = vmul.f32 %v60, %v60
    %v63 = vmul.f32 %v61, %v61
    %64 = vadd.xlane.f32.xlu0 %v62
    %v65 = vpop.xlane.xlu0 %64
    %66 = vadd.xlane.f32.xlu0 %v63
    %v67 = vpop.xlane.xlu0 %66
    %v68 = vmul.f32 %v65, %v57
    %v69 = vmul.f32 %v67, %v57
    %v70 = vadd.f32 %v68, 1e-05
    %v71 = vadd.f32 %v69, 1e-05
    %v72 = vrsqrt.pop %v70
    %v73 = vmul.f32 %v72, %v70
    %v74 = vmul.f32 %v73, %v72
    %v75 = vmul.f32 0.5, %v74
    %v76 = vsub.f32 1.5, %v75
    %v77 = vmul.f32 %v72, %v76
    %vm78 = vweird.f32 %v70
    %vm79 = vweird.f32 %v72
    %vm80 = vmor %vm78, %vm79
    %v81 = vsel %vm80, %v72, %v77
    %v82 = vrsqrt.pop %v71
    %v83 = vmul.f32 %v82, %v71
    %v84 = vmul.f32 %v83, %v82
    %v85 = vmul.f32 0.5, %v84
    %v86 = vsub.f32 1.5, %v85
    %v87 = vmul.f32 %v82, %v86
    %vm88 = vweird.f32 %v71
    %vm89 = vweird.f32 %v82
    %vm90 = vmor %vm88, %vm89
    %v91 = vsel %vm90, %v82, %v87
    %v92 = vmul.f32 %v60, %v81
    %v93 = vmul.f32 %v61, %v91
    %v94 = vld [vmem:[#allocation5] sm:$0x1]
    %v96 = vperm.slane %v94, 0
    %v98 = vmul.f32 %v92, %v96
    %v99 = vmul.f32 %v93, %v96
    %v100 = vld [vmem:[%s2] sm:$0x1]
    %v102 = vperm.slane %v100, 0
    %v104 = vadd.f32 %v98, %v102
    %v105 = vadd.f32 %v99, %v102
    %106 = vst [vmem:[#allocation7] sm:$0xff] %v104
    %107 = vst [vmem:[#allocation7 + $0x8] sm:$0xff] %v105
    // Predicated region
    $region22: #{tpu_custom_call.1} parent=1 // pred_check
      _
    $region23: #{tpu_custom_call.1} parent=1 // pred_check_branch
      %109 = sbr.rel (0) target = $region25
    $region24: #{tpu_custom_call.1} parent=1 // pred_region
      %111 = vsyncadd [#allocation4], 0
      %s112 = sshll.u32 [#allocation7], 4
      %s113 = int_to_ptr.vmem [resolvable:$true] %s112
      %s114 = sshll.u32 %s3, 4
      %s115 = int_to_ptr.hbm [resolvable:$true] %s114
      %120 = dma.vmem_to_hbm [thread:$0]  %s113, 256, %s115, [#allocation4], 128, 128, 8
    $region25: #{tpu_custom_call.1} parent=1 // pred_fallthru
      _
    // Predicated region
    $region26: #{tpu_custom_call.1} parent=1 // pred_check
      _
    $region27: #{tpu_custom_call.1} parent=1 // pred_check_branch
      %122 = sbr.rel (0) target = $region29
    $region28: #{tpu_custom_call.1} parent=1 // pred_region
      %124 = dma.done [#allocation4], 256
    $region29: #{tpu_custom_call.1} parent=1 // pred_fallthru
      _
    %125 = vsyncpa [#allocation3], 1
    %126 = vsyncpa [#allocation6], 1
    %127 = vsyncpa [#allocation4], 1

</llo_original>
